<compile_context>
chip_gen: v7x
topology: tpu7x:2x2x1
jax: 0.10.0
libtpu: 0.0.40
codegen_flags: <defaults>
</compile_context>

<pallas_src>
import jax
import jax.numpy as jnp
from jax.experimental import pallas as pl
from jax.experimental.pallas import tpu as pltpu

_LANE = 128
_SUBLANE = 8


def _pos_enc_kernel(x_ref, pe_ref, o_ref):
    # x_ref: (tb, tf); pe_ref: (1, tf) -> broadcast over the batch sublanes.
    o_ref[...] = (x_ref[...] + pe_ref[...]).astype(o_ref.dtype)


def _device_kind():
    try:
        return jax.devices()[0].device_kind.lower()
    except Exception:
        return ""


def _is_v7x(kind):
    return ("v7" in kind) or ("7x" in kind)


def _default_vmem_budget(kind):
    # Total budget for the double-buffered x/out/pe tiles (not the scoped limit).
    if _is_v7x(kind):
        return 36 << 20   # 64 MiB physical VMEM: bigger tiles amortize per-step cost
    if "v6" in kind:
        return 24 << 20   # 32 MiB default scoped / 128 MiB physical
    return 12 << 20       # stays under v5e's 16 MiB default scoped-VMEM limit


def _plan_tiles(B, F, x_item, pe_item, vmem_budget, force_two_programs):
    # 1) Sublane (batch) tile first: full batch when small, else a multiple of
    #    8 (16 for bf16, 32 for int8) so packed sublanes stay full.
    sub = _SUBLANE * max(1, 4 // x_item)
    tb = B if B <= sub else sub

    # 2) Lane (F) tile second, from a VMEM budget that uses the actual dtypes
    #    and sublane padding: x + out double buffers (tb_pad x tf) plus the pe
    #    double buffer ((1, tf) pads to 8 sublanes).
    tb_pad = -(-tb // _SUBLANE) * _SUBLANE
    per_tf_byte = (2 * tb_pad * x_item        # x double buffer
                   + 2 * tb_pad * x_item      # out double buffer (out dtype == x dtype)
                   + 2 * _SUBLANE * pe_item)  # pe double buffer (1 row -> 8 sublanes)
    tf_budget = (vmem_budget // per_tf_byte) // _LANE * _LANE
    if tf_budget >= F or F <= _LANE:
        tf = F                       # full extent: legal for any F
    else:
        tf = max(tf_budget, _LANE)   # tf < F  =>  tf % 128 == 0 (BlockSpec-legal)

    # 3) v7x only: expose >= 2 programs so both TensorCores get work.
    if force_two_programs and F >= 2 * _LANE:
        if pl.cdiv(F, tf) * pl.cdiv(B, tb) == 1:
            tf = -(-(F // 2) // _LANE) * _LANE   # ~F/2, 128-aligned, < F

    return tb, tf, tb_pad


def positional_encoding(x, pe, *, min_pallas_bytes=1 << 20, vmem_budget=None):
    """x: (B, S, D), pe: (1, max_len, D). Returns x + pe[:, :S] (cast to x.dtype)."""
    B, S, D = x.shape
    pe_b, max_len, pe_d = pe.shape
    assert pe_b == 1 and pe_d == D, "pe must have shape (1, max_len, d_model)"
    assert S <= max_len, f"sequence length {S} exceeds max_len {max_len}"

    F = S * D
    x_item = jnp.dtype(x.dtype).itemsize
    pe_item = jnp.dtype(pe.dtype).itemsize

    # Tiny inputs (or lane-starved F): the pallas_call fixed cost dominates —
    # a fused XLA add is strictly cheaper.
    if F < _LANE or B * F * x_item < min_pallas_bytes:
        return (x + pe[:, :S]).astype(x.dtype)

    kind = _device_kind()
    if vmem_budget is None:
        vmem_budget = _default_vmem_budget(kind)

    tb, tf, tb_pad = _plan_tiles(B, F, x_item, pe_item, vmem_budget, _is_v7x(kind))

    # Explicit scoped-VMEM limit from the real padded, double-buffered footprint.
    tf_pad = -(-tf // _LANE) * _LANE
    footprint = (2 * tb_pad * tf_pad * x_item        # x double buffer
                 + 2 * tb_pad * tf_pad * x_item      # out double buffer
                 + 2 * _SUBLANE * tf_pad * pe_item)  # pe double buffer
    vmem_limit = max(footprint + footprint // 4 + (2 << 20), 16 << 20)

    # Metadata-only reshape of x; tiny one-time slice of pe to exactly (1, F)
    # so the full-extent (tf == F) pe block is legal even when F % 128 != 0
    # and S < max_len.
    x2 = x.reshape(B, F)
    pe2 = pe[:, :S, :].reshape(1, F)

    grid = (pl.cdiv(F, tf), pl.cdiv(B, tb))  # batch innermost -> pe tile reused

    out2 = pl.pallas_call(
        _pos_enc_kernel,
        out_shape=jax.ShapeDtypeStruct((B, F), x.dtype),
        grid_spec=pltpu.PrefetchScalarGridSpec(
            num_scalar_prefetch=0,
            grid=grid,
            in_specs=[
                pl.BlockSpec((tb, tf), lambda f, b: (b, f)),  # x tile
                pl.BlockSpec((1, tf), lambda f, b: (0, f)),   # pe tile (const over b)
            ],
            out_specs=pl.BlockSpec((tb, tf), lambda f, b: (b, f)),
        ),
        compiler_params=pltpu.CompilerParams(
            dimension_semantics=("parallel", "parallel"),
            vmem_limit_bytes=int(vmem_limit),
        ),
    )(x2, pe2)

    return out2.reshape(B, S, D)


if __name__ == "__main__":
    key = jax.random.PRNGKey(0)
    k1, k2, k3, k4, k5, k6 = jax.random.split(key, 6)

    def ref_fn(x, pe):
        s = x.shape[1]
        return (x.astype(jnp.float32) + pe[:, :s].astype(jnp.float32)).astype(x.dtype)

    # Case 1: canonical tiny shape -> takes the XLA short-circuit path.
    x1 = jax.random.normal(k1, (2, 8, 32), dtype=jnp.float32)
    pe1 = jax.random.normal(k2, (1, 16, 32), dtype=jnp.float32)
    o1 = positional_encoding(x1, pe1)
    jax.block_until_ready(o1)
    assert o1.shape == x1.shape and o1.dtype == x1.dtype
    assert jnp.allclose(o1, ref_fn(x1, pe1), atol=1e-6), "mismatch (XLA path)"

    # Case 2: force the Pallas path at the same small shape (tf == F, F % 128 == 0).
    o2 = positional_encoding(x1, pe1, min_pallas_bytes=0)
    jax.block_until_ready(o2)
    assert jnp.allclose(o2, ref_fn(x1, pe1), atol=1e-6), "mismatch (Pallas, F%128==0)"

    # Case 3: F = S*D = 800 (NOT a multiple of 128), S < max_len — exercises the
    # full-extent pe block made legal by the wrapper-side pe[:, :S] slice.
    x3 = jax.random.normal(k3, (3, 10, 80), dtype=jnp.float32)
    pe3 = jax.random.normal(k4, (1, 16, 80), dtype=jnp.float32)
    o3 = positional_encoding(x3, pe3, min_pallas_bytes=0)
    jax.block_until_ready(o3)
    assert jnp.allclose(o3, ref_fn(x3, pe3), atol=1e-6), "mismatch (Pallas, F%128!=0)"

    # Case 4: tiny VMEM budget -> multi-tile F with a partial last tile, plus
    # mixed dtypes (bf16 x, f32 pe) to exercise the dtype-aware VMEM accounting.
    x4 = jax.random.normal(k5, (4, 34, 56), dtype=jnp.float32).astype(jnp.bfloat16)
    pe4 = jax.random.normal(k6, (1, 40, 56), dtype=jnp.float32)
    o4 = positional_encoding(x4, pe4, min_pallas_bytes=0, vmem_budget=96 * 1024)
    jax.block_until_ready(o4)
    assert o4.shape == x4.shape and o4.dtype == jnp.bfloat16
    assert jnp.allclose(o4.astype(jnp.float32), ref_fn(x4, pe4).astype(jnp.float32),
                        atol=1e-2), "mismatch (Pallas, tiled F, bf16 x + f32 pe)"

    print("KERNEL_OK")
</pallas_src>

<mosaic_0001>
module attributes {stable_mosaic.version = 11 : i64} {
  func.func @_pos_enc_kernel(%arg0: i32, %arg1: i32, %arg2: memref<2x256xf32, #tpu.memory_space<vmem>>, %arg3: memref<1x256xf32, #tpu.memory_space<vmem>>, %arg4: memref<2x256xf32, #tpu.memory_space<vmem>>) attributes {dimension_semantics = [#tpu.dimension_semantics<parallel>, #tpu.dimension_semantics<parallel>], iteration_bounds = array<i64: 1, 1>, scalar_prefetch = 0 : i64, scratch_operands = 0 : i64, tpu.core_type = #tpu.core_type<tc>, window_params = [{transform_indices = @transform_0, window_bounds = array<i64: 2, 256>}, {transform_indices = @transform_1, window_bounds = array<i64: 1, 256>}, {transform_indices = @transform_2, window_bounds = array<i64: 2, 256>}]} {
    %c0 = arith.constant 0 : index
    %c0_0 = arith.constant 0 : index
    %0 = vector.load %arg2[%c0, %c0_0] : memref<2x256xf32, #tpu.memory_space<vmem>>, vector<2x256xf32>
    %c0_1 = arith.constant 0 : index
    %c0_2 = arith.constant 0 : index
    %1 = vector.load %arg3[%c0_1, %c0_2] : memref<1x256xf32, #tpu.memory_space<vmem>>, vector<1x256xf32>
    %2 = vector.broadcast %1 : vector<1x256xf32> to vector<2x256xf32>
    %3 = arith.addf %0, %2 : vector<2x256xf32>
    %c0_3 = arith.constant 0 : index
    %c0_4 = arith.constant 0 : index
    %4 = vector.load %arg4[%c0_3, %c0_4] : memref<2x256xf32, #tpu.memory_space<vmem>>, vector<2x256xf32>
    tpu.vector_store %arg4[%c0_3, %c0_4], %3 {strides = array<i32>} : memref<2x256xf32, #tpu.memory_space<vmem>>, vector<2x256xf32>,
    return
  }
  func.func @transform_0(%arg0: i32, %arg1: i32) -> (i32, i32) {
    %c0_i32 = arith.constant 0 : i32
    return %arg1, %arg0 : i32, i32
  }
  func.func @transform_1(%arg0: i32, %arg1: i32) -> (i32, i32) {
    %c0_i32 = arith.constant 0 : i32
    %c0_i32_0 = arith.constant 0 : i32
    return %c0_i32, %arg0 : i32, i32
  }
  func.func @transform_2(%arg0: i32, %arg1: i32) -> (i32, i32) {
    %c0_i32 = arith.constant 0 : i32
    return %arg1, %arg0 : i32, i32
  }
}

</mosaic_0001>

<llo_original>
// kernel: tpu_custom_call.1
$region0: #{tpu_custom_call.1}
  #allocation0 [shape = 'u32[]', space=smem, size = 0x4, offset = 0x4, fixed_abs, tag = 'smem constant byte address 0x4 - core index']
  #allocation1 [shape = 'u32[144,128]{1,0:T(1,128)}', space=vmem, size = 0x12000, scoped, tag = 'internal scratch']
  %s0 = inlined_call_operand.hbm [shape: f32[2,256], index: 0, kind: input, shape index: {}]
  %s1 = inlined_call_operand.vmem [shape: f32[1,256], index: 1, kind: input, shape index: {}]
  %s2 = inlined_call_operand.hbm [shape: f32[2,256], index: 2, kind: output, shape index: {}]
  %s3 = sld [smem:[#allocation0]]
  $region22: #{tpu_custom_call.1} parent=0
    _
  %s5 = ssub.s32 1, %s3
  %s6 = scalar_select 0, %s5, %s3
  $region1: #{tpu_custom_call.1} parent=0
    #allocation2 [shape = 'u8[2048]{0}', space=vmem, size = 0x800, scoped, tag = 'input window, operand 0, single buffered']
    #allocation3 [shape = 's32[1]{0}', space=sflag, size = 0x4, scoped, tag = 'scoped memory for tpu_custom_call.1']
    #allocation4 [shape = 's32[1]{0}', space=sflag, size = 0x4, scoped, tag = 'scoped memory for tpu_custom_call.1']
    #allocation5 [shape = 'u8[2048]{0}', space=vmem, size = 0x800, scoped, tag = 'output window, operand 0, single buffered']
    %7 = vsyncpa [#allocation3], 0
    %8 = vsyncpa [#allocation4], 0
    // Predicated region
    $region2: #{tpu_custom_call.1} parent=1 // pred_check
      _
    $region3: #{tpu_custom_call.1} parent=1 // pred_check_branch
      %10 = sbr.rel (0) target = $region5
    $region4: #{tpu_custom_call.1} parent=1 // pred_region
      %s12 = ssub.s32 64, 64
      %13 = vsyncadd [#allocation3], %s12
      %s15 = sshll.u32 [#allocation2], 4
      %s16 = int_to_ptr.vmem [resolvable:$true] %s15
      %18 = dma.hbm_to_vmem [thread:$0]  %s0, 64, %s16, [#allocation3]
    $region5: #{tpu_custom_call.1} parent=1 // pred_fallthru
      _
    // Predicated region
    $region6: #{tpu_custom_call.1} parent=1 // pred_check
      _
    $region7: #{tpu_custom_call.1} parent=1 // pred_check_branch
      %20 = sbr.rel (0) target = $region9
    $region8: #{tpu_custom_call.1} parent=1 // pred_region
      _
    $region9: #{tpu_custom_call.1} parent=1 // pred_fallthru
      _
    // Predicated region
    $region10: #{tpu_custom_call.1} parent=1 // pred_check
      _
    $region11: #{tpu_custom_call.1} parent=1 // pred_check_branch
      %22 = sbr.rel (0) target = $region13
    $region12: #{tpu_custom_call.1} parent=1 // pred_region
      %23 = dma.done [#allocation3], 64
    $region13: #{tpu_custom_call.1} parent=1 // pred_fallthru
      _
    %v24 = vld [vmem:[#allocation2] sm:$0xf]
    %v25 = vld [vmem:[%s1] sm:$0x3]
    %v27 = vlaneseq
    %v28 = vshrl.u32 %v27, 7
    %v29 = vsub.s32 0, %v28
    %v30 = vrot.slane %v25, %v29
    %v31 = vlaneseq
    %v32 = vshrl.u32 %v31, 7
    %v33 = vsub.s32 1, %v32
    %v34 = vrot.slane %v25, %v33
    %v35 = vcombine.low %v30, %v34
    %v37 = vunpack.c.l.s4 1983009808
    %v38 = vunpack.c.0.s8 %v37
    %v39 = vlaneseq
    %v40 = vshrl.u32 %v39, 7
    %v41 = vsub.s32 %v38, %v40
    %v42 = vrot.slane %v35, %v41
    %v44 = vadd.f32 %v24, %v42
    %45 = vst [vmem:[#allocation5] sm:$0xf] %v44
    // Predicated region
    $region14: #{tpu_custom_call.1} parent=1 // pred_check
      _
    $region15: #{tpu_custom_call.1} parent=1 // pred_check_branch
      %47 = sbr.rel (0) target = $region17
    $region16: #{tpu_custom_call.1} parent=1 // pred_region
      %s49 = ssub.s32 64, 64
      %50 = vsyncadd [#allocation4], %s49
      %s52 = sshll.u32 [#allocation5], 4
      %s53 = int_to_ptr.vmem [resolvable:$true] %s52
      %55 = dma.vmem_to_hbm [thread:$0]  %s53, 64, %s2, [#allocation4]
    $region17: #{tpu_custom_call.1} parent=1 // pred_fallthru
      _
    // Predicated region
    $region18: #{tpu_custom_call.1} parent=1 // pred_check
      _
    $region19: #{tpu_custom_call.1} parent=1 // pred_check_branch
      %57 = sbr.rel (0) target = $region21
    $region20: #{tpu_custom_call.1} parent=1 // pred_region
      %58 = dma.done [#allocation4], 64
    $region21: #{tpu_custom_call.1} parent=1 // pred_fallthru
      _
    %59 = vsyncpa [#allocation3], 1
    %60 = vsyncpa [#allocation4], 1

</llo_original>
